<compile_context>
chip_gen: v6e
topology: v6e:2x2x1
jax: 0.10.0
libtpu: 0.0.40
codegen_flags: <defaults>
</compile_context>

<pallas_src>
import functools

import jax
import jax.numpy as jnp
from jax.experimental import pallas as pl
from jax.experimental.pallas import tpu as pltpu


def _round_up(x, m):
    return (x + m - 1) // m * m


def _unpool_kernel(idx_ref, x_ref, o_ref, *, row_axis):
    # idx_ref : (1, k_pad)   int32 (replicated; padded entries are -1)
    # x_ref   : (k_pad, tF)  feature block (full F resident, or a feature tile)
    # o_ref   : (tr, tF)     output row-tile x feature-tile
    i = pl.program_id(row_axis)
    tr = o_ref.shape[0]

    # (tr, 1) column of global row ids; broadcasting against the (1, k_pad)
    # idx row forms the (tr, k_pad) one-hot without a materialized 2-D iota.
    row_ids = i * tr + jax.lax.broadcasted_iota(jnp.int32, (tr, 1), 0)
    onehot = (row_ids == idx_ref[...]).astype(x_ref.dtype)        # (tr, k_pad)

    # Scatter-as-matmul on the MXU; rows with no matching idx entry become 0.
    o_ref[...] = jnp.dot(
        onehot, x_ref[...], preferred_element_type=jnp.float32
    ).astype(o_ref.dtype)


def graph_unpool(A, X, idx, *, tile_rows=256, tile_cols=256,
                 resident_budget_bytes=24 << 20):
    """Pallas implementation of GraphUnpool.forward -> (A, new_X)."""
    N = A.shape[0]
    k, F = X.shape
    dtype = X.dtype
    dsize = jnp.dtype(dtype).itemsize

    # Contraction dim padded to the MXU lane width; padded idx entries (-1)
    # never match a non-negative row id.  (k is small for GraphUnpool, so 128
    # keeps the one-hot narrow; 256 would fully fill a v6e/v7x MXU pass.)
    k_pad = _round_up(max(k, 1), 128)
    X_p = jnp.pad(X, ((0, k_pad - k), (0, 0)))                    # pad k only
    idx_p = jnp.pad(idx.astype(jnp.int32), (0, k_pad - k),
                    constant_values=-1).reshape(1, k_pad)

    tr = min(_round_up(max(int(tile_rows), 8), 8), _round_up(N, 8))
    n_row_tiles = pl.cdiv(N, tr)

    # In-kernel temporaries regenerated every step: one-hot (X dtype) + the
    # bool compare result + f32 matmul accumulator.
    def _temp_bytes(tf):
        return tr * k_pad * (4 + dsize) + tr * tf * 4

    # --- path 1: X fully resident, 1-D grid over row tiles ------------------
    resident_bytes = (2 * 8 * k_pad * 4            # idx block (sublane-padded, x2 buffers)
                      + 2 * k_pad * F * dsize      # X block (double-buffered)
                      + 2 * tr * F * dsize         # output block (double-buffered)
                      + _temp_bytes(F))
    use_resident = resident_bytes <= resident_budget_bytes

    if use_resident:
        tf = F
        n_feat_tiles = 1
        grid = (n_row_tiles,)
        in_specs = [
            pl.BlockSpec((1, k_pad), lambda i: (0, 0)),            # idx (replicated)
            pl.BlockSpec((k_pad, F), lambda i: (0, 0)),            # X resident
        ]
        out_specs = pl.BlockSpec((tr, F), lambda i: (i, 0))
        dim_sem = ("parallel",)
        kernel = functools.partial(_unpool_kernel, row_axis=0)
        block_bytes = resident_bytes
    else:
        # --- path 2: feature tiles OUTER, row tiles INNER --------------------
        # X's block index (0, j) only changes on the outer axis, so the DMA is
        # skipped across consecutive inner steps (X streamed from HBM ~once).
        tf = min(_round_up(max(int(tile_cols), 128), 128), _round_up(F, 128))
        n_feat_tiles = pl.cdiv(F, tf)
        grid = (n_feat_tiles, n_row_tiles)
        in_specs = [
            pl.BlockSpec((1, k_pad), lambda j, i: (0, 0)),          # idx (replicated)
            pl.BlockSpec((k_pad, tf), lambda j, i: (0, j)),         # X feature tile
        ]
        out_specs = pl.BlockSpec((tr, tf), lambda j, i: (i, j))
        dim_sem = ("parallel", "parallel")
        kernel = functools.partial(_unpool_kernel, row_axis=1)
        block_bytes = (2 * 8 * k_pad * 4 + 2 * k_pad * tf * dsize
                       + 2 * tr * tf * dsize + _temp_bytes(tf))

    # VMEM request: blocks + temps + headroom, capped below v7x's 64 MiB.
    vmem_limit = int(min(max(block_bytes + (4 << 20), 16 << 20), 48 << 20))

    cost = pl.CostEstimate(
        flops=2 * n_row_tiles * tr * k_pad * n_feat_tiles * tf,
        transcendentals=0,
        bytes_accessed=k_pad * F * dsize + N * F * dsize + k_pad * 4,
    )

    new_X = pl.pallas_call(
        kernel,
        out_shape=jax.ShapeDtypeStruct((N, F), dtype),
        grid=grid,
        in_specs=in_specs,
        out_specs=out_specs,
        compiler_params=pltpu.CompilerParams(
            dimension_semantics=dim_sem,
            vmem_limit_bytes=vmem_limit,
        ),
        cost_estimate=cost,
    )(idx_p, X_p)

    # A is returned unchanged (PyTorch only densifies / moves device).
    return A, new_X


def _check_case(key, N, k, F, **kwargs):
    k_a, k_x, k_i = jax.random.split(key, 3)
    A = jax.random.normal(k_a, (N, N), dtype=jnp.float32)
    X = jax.random.normal(k_x, (k, F), dtype=jnp.float32)
    idx = jax.random.permutation(k_i, N)[:k].astype(jnp.int32)    # unique indices

    A_out, new_X = graph_unpool(A, X, idx, **kwargs)
    jax.block_until_ready((A_out, new_X))

    ref = jnp.zeros((N, F), dtype=jnp.float32).at[idx].set(X)
    assert A_out.shape == (N, N)
    assert new_X.shape == (N, F)
    assert jnp.allclose(new_X, ref, atol=1e-6), "scatter mismatch"
    assert jnp.allclose(A_out, A), "A passthrough mismatch"


if __name__ == "__main__":
    key = jax.random.PRNGKey(0)
    k1, k2 = jax.random.split(key)

    # Small case matching the module's typical toy sizes (resident-X path).
    _check_case(k1, N=16, k=8, F=32)

    # Larger, non-tile-aligned case forcing the tiled (features-outer) path,
    # exercising boundary masking on both row and feature axes.
    _check_case(k2, N=300, k=40, F=200, tile_rows=128, tile_cols=128,
                resident_budget_bytes=0)

    print("KERNEL_OK")
</pallas_src>

<mosaic_0001>
module attributes {stable_mosaic.version = 11 : i64} {
  func.func @_unpool_kernel(%arg0: i32, %arg1: memref<1x128xi32, #tpu.memory_space<vmem>>, %arg2: memref<128x32xf32, #tpu.memory_space<vmem>>, %arg3: memref<16x32xf32, #tpu.memory_space<vmem>>) attributes {dimension_semantics = [#tpu.dimension_semantics<parallel>], iteration_bounds = array<i64: 1>, scalar_prefetch = 0 : i64, scratch_operands = 0 : i64, tpu.core_type = #tpu.core_type<tc>, window_params = [{pipeline_mode = #tpu.pipeline_mode<synchronous>, transform_indices = @transform_0, window_bounds = array<i64: 1, 128>}, {pipeline_mode = #tpu.pipeline_mode<synchronous>, transform_indices = @transform_1, window_bounds = array<i64: 128, 32>}, {transform_indices = @transform_2, window_bounds = array<i64: 16, 32>}]} {
    %c16_i32 = arith.constant 16 : i32
    %0 = arith.muli %arg0, %c16_i32 : i32
    %1 = tpu.iota {dimensions = array<i32: 0>} : vector<16x1xi32>
    %2 = vector.broadcast %0 : i32 to vector<16x1xi32>
    %3 = arith.addi %2, %1 : vector<16x1xi32>
    %c0 = arith.constant 0 : index
    %c0_0 = arith.constant 0 : index
    %4 = vector.load %arg1[%c0, %c0_0] : memref<1x128xi32, #tpu.memory_space<vmem>>, vector<1x128xi32>
    %5 = vector.broadcast %3 : vector<16x1xi32> to vector<16x128xi32>
    %6 = vector.broadcast %4 : vector<1x128xi32> to vector<16x128xi32>
    %7 = arith.cmpi eq, %5, %6 : vector<16x128xi32>
    %8 = arith.extui %7 : vector<16x128xi1> to vector<16x128xi32>
    %9 = arith.sitofp %8 : vector<16x128xi32> to vector<16x128xf32>
    %c0_1 = arith.constant 0 : index
    %c0_2 = arith.constant 0 : index
    %10 = vector.load %arg2[%c0_1, %c0_2] : memref<128x32xf32, #tpu.memory_space<vmem>>, vector<128x32xf32>
    %cst = arith.constant dense<0.000000e+00> : vector<16x32xf32>
    %11 = tpu.matmul %9, %10, %cst {dimension_numbers = #tpu.dot_dimension_numbers<[1], [0], [0], [1], [0, 0, 1, 1], [], []>} : vector<16x128xf32>, vector<128x32xf32>, vector<16x32xf32> -> vector<16x32xf32>
    %c0_3 = arith.constant 0 : index
    %c0_4 = arith.constant 0 : index
    %12 = vector.load %arg3[%c0_3, %c0_4] : memref<16x32xf32, #tpu.memory_space<vmem>>, vector<16x32xf32>
    tpu.vector_store %arg3[%c0_3, %c0_4], %11 {strides = array<i32>} : memref<16x32xf32, #tpu.memory_space<vmem>>, vector<16x32xf32>,
    return
  }
  func.func @transform_0(%arg0: i32) -> (i32, i32) {
    %c0_i32 = arith.constant 0 : i32
    %c0_i32_0 = arith.constant 0 : i32
    %c0_i32_1 = arith.constant 0 : i32
    return %c0_i32, %c0_i32_0 : i32, i32
  }
  func.func @transform_1(%arg0: i32) -> (i32, i32) {
    %c0_i32 = arith.constant 0 : i32
    %c0_i32_0 = arith.constant 0 : i32
    %c0_i32_1 = arith.constant 0 : i32
    return %c0_i32, %c0_i32_0 : i32, i32
  }
  func.func @transform_2(%arg0: i32) -> (i32, i32) {
    %c0_i32 = arith.constant 0 : i32
    %c0_i32_0 = arith.constant 0 : i32
    return %arg0, %c0_i32 : i32, i32
  }
}

</mosaic_0001>

<llo_original>
// kernel: tpu_custom_call.1
$region0: #{tpu_custom_call.1}
  #allocation0 [shape = 'u32[]', space=smem, size = 0x4, offset = 0x4, fixed_abs, tag = 'smem constant byte address 0x4 - core index']
  #allocation1 [shape = 'u32[144,128]{1,0:T(1,128)}', space=vmem, size = 0x12000, scoped, tag = 'internal scratch']
  %s0 = inlined_call_operand.vmem [shape: s32[1,128], index: 0, kind: input, shape index: {}]
  %s1 = inlined_call_operand.vmem [shape: f32[128,32], index: 1, kind: input, shape index: {}]
  %s2 = inlined_call_operand.hbm [shape: f32[16,32], index: 2, kind: output, shape index: {}]
  %s3 = sld [smem:[#allocation0]]
  $region18: #{tpu_custom_call.1} parent=0
    _
  %s5 = ssub.s32 1, %s3
  %s6 = scalar_select 0, %s5, %s3
  $region1: #{tpu_custom_call.1} parent=0
    #allocation2 [shape = 'u8[8192]{0}', space=vmem, size = 0x2000, scoped, tag = 'output window, operand 0, single buffered']
    #allocation3 [shape = 's32[1]{0}', space=sflag, size = 0x4, scoped, tag = 'scoped memory for tpu_custom_call.1']
    %7 = vsyncpa [#allocation3], 0
    // Predicated region
    $region2: #{tpu_custom_call.1} parent=1 // pred_check
      _
    $region3: #{tpu_custom_call.1} parent=1 // pred_check_branch
      %9 = sbr.rel (0) target = $region5
    $region4: #{tpu_custom_call.1} parent=1 // pred_region
      _
    $region5: #{tpu_custom_call.1} parent=1 // pred_fallthru
      _
    // Predicated region
    $region6: #{tpu_custom_call.1} parent=1 // pred_check
      _
    $region7: #{tpu_custom_call.1} parent=1 // pred_check_branch
      %11 = sbr.rel (0) target = $region9
    $region8: #{tpu_custom_call.1} parent=1 // pred_region
      _
    $region9: #{tpu_custom_call.1} parent=1 // pred_fallthru
      _
    %s12 = smul.u32 0, 16
    %v13 = vlaneseq
    %v14 = vshrl.u32 %v13, 7
    %v15 = vadd.s32 %v14, 8
    %v16 = vstv %s12
    %v17 = vadd.s32 %v16, %v14
    %v18 = vadd.s32 %v16, %v15
    %v19 = vld [vmem:[%s0] sm:$0x1]
    %v20 = vlaneseq
    %v21 = vshrl.u32 %v20, 7
    %v22 = vsub.s32 0, %v21
    %v23 = vrot.slane %v19, %v22
    %vm24 = vcmp.eq.s32.totalorder %v17, %v23
    %vm25 = vcmp.eq.s32.totalorder %v18, %v23
    %v26 = vsel %vm24, 1, 0
    %v27 = vsel %vm25, 1, 0
    %v28 = vcvt.s32.f32 %v26
    %v29 = vcvt.s32.f32 %v27
    %v30 = vld [vmem:[%s1] sm:$0xff]
    %v31 = vld [vmem:[%s1 + $0x8] sm:$0xff]
    %v32 = vld [vmem:[%s1 + $0x10] sm:$0xff]
    %v33 = vld [vmem:[%s1 + $0x18] sm:$0xff]
    %v34 = vld [vmem:[%s1 + $0x20] sm:$0xff]
    %v35 = vld [vmem:[%s1 + $0x28] sm:$0xff]
    %v36 = vld [vmem:[%s1 + $0x30] sm:$0xff]
    %v37 = vld [vmem:[%s1 + $0x38] sm:$0xff]
    %v38 = vld [vmem:[%s1 + $0x40] sm:$0xff]
    %v39 = vld [vmem:[%s1 + $0x48] sm:$0xff]
    %v40 = vld [vmem:[%s1 + $0x50] sm:$0xff]
    %v41 = vld [vmem:[%s1 + $0x58] sm:$0xff]
    %v42 = vld [vmem:[%s1 + $0x60] sm:$0xff]
    %v43 = vld [vmem:[%s1 + $0x68] sm:$0xff]
    %v44 = vld [vmem:[%s1 + $0x70] sm:$0xff]
    %v45 = vld [vmem:[%s1 + $0x78] sm:$0xff]
    %46 = vmatprep.subr.mxu0 0.0
    %47 = vmatpush1.msra.mxu0 %v45
    %48 = vmatprep.subr.mxu0 0.0
    %49 = vmatpush1.msra.mxu0 %v44
    %50 = vmatprep.subr.mxu0 0.0
    %51 = vmatpush1.msra.mxu0 %v43
    %52 = vmatprep.subr.mxu0 0.0
    %53 = vmatpush1.msra.mxu0 %v42
    %54 = vmatprep.subr.mxu0 0.0
    %55 = vmatpush1.msra.mxu0 %v41
    %56 = vmatprep.subr.mxu0 0.0
    %57 = vmatpush1.msra.mxu0 %v40
    %58 = vmatprep.subr.mxu0 0.0
    %59 = vmatpush1.msra.mxu0 %v39
    %60 = vmatprep.subr.mxu0 0.0
    %61 = vmatpush1.msra.mxu0 %v38
    %62 = vmatprep.subr.mxu0 0.0
    %63 = vmatpush1.msra.mxu0 %v37
    %64 = vmatprep.subr.mxu0 0.0
    %65 = vmatpush1.msra.mxu0 %v36
    %66 = vmatprep.subr.mxu0 0.0
    %67 = vmatpush1.msra.mxu0 %v35
    %68 = vmatprep.subr.mxu0 0.0
    %69 = vmatpush1.msra.mxu0 %v34
    %70 = vmatprep.subr.mxu0 0.0
    %71 = vmatpush1.msra.mxu0 %v33
    %72 = vmatprep.subr.mxu0 0.0
    %73 = vmatpush1.msra.mxu0 %v32
    %74 = vmatprep.subr.mxu0 0.0
    %75 = vmatpush1.msra.mxu0 %v31
    %76 = vmatprep.subr.mxu0 0.0
    %77 = vmatpush1.msra.mxu0 %v30
    %78 = vmatprep.subr.mxu0 0.0
    %79 = vmatpush2.msra.mxu0 0.0
    %80 = vmatprep.subr.mxu0 0.0
    %81 = vmatpush2.msra.mxu0 0.0
    %82 = vmatprep.subr.mxu0 0.0
    %83 = vmatpush2.msra.mxu0 0.0
    %84 = vmatprep.subr.mxu0 0.0
    %85 = vmatpush2.msra.mxu0 0.0
    %86 = vmatprep.subr.mxu0 0.0
    %87 = vmatpush2.msra.mxu0 0.0
    %88 = vmatprep.subr.mxu0 0.0
    %89 = vmatpush2.msra.mxu0 0.0
    %90 = vmatprep.subr.mxu0 0.0
    %91 = vmatpush2.msra.mxu0 0.0
    %92 = vmatprep.subr.mxu0 0.0
    %93 = vmatpush2.msra.mxu0 0.0
    %94 = vmatprep.subr.mxu0 0.0
    %95 = vmatpush2.msra.mxu0 0.0
    %96 = vmatprep.subr.mxu0 0.0
    %97 = vmatpush2.msra.mxu0 0.0
    %98 = vmatprep.subr.mxu0 0.0
    %99 = vmatpush2.msra.mxu0 0.0
    %100 = vmatprep.subr.mxu0 0.0
    %101 = vmatpush2.msra.mxu0 0.0
    %102 = vmatprep.subr.mxu0 0.0
    %103 = vmatpush2.msra.mxu0 0.0
    %104 = vmatprep.subr.mxu0 0.0
    %105 = vmatpush2.msra.mxu0 0.0
    %106 = vmatprep.subr.mxu0 0.0
    %107 = vmatpush2.msra.mxu0 0.0
    %108 = vmatprep.subr.mxu0 0.0
    %109 = vmatpush2.msra.mxu0 0.0
    %110 = vmatprep.mubr.f32.mxu0 0.0
    %111 = vmatmul.mubr.f32.gmra.mxu0 %v28
    %v112 = vpop.f32.mrf.mxu0
    %v113 = vadd.f32 0.0, %v112
    %v114 = vpop.f32.mrf.mxu0
    %115 = vmatprep.mubr.f32.mxu0 0.0
    %116 = vmatmul.mubr.f32.gmra.mxu0 %v29
    %v117 = vpop.f32.mrf.mxu0
    %v118 = vadd.f32 0.0, %v117
    %v119 = vpop.f32.mrf.mxu0
    %120 = vdwg.mxu0
    %vm121 = vcmask 261120
    %122 = vst.msk [vmem:[#allocation2] sm:$0xff] %vm121, %v113
    %123 = vst.msk [vmem:[#allocation2 + $0x8] sm:$0xff] %vm121, %v118
    // Predicated region
    $region10: #{tpu_custom_call.1} parent=1 // pred_check
      _
    $region11: #{tpu_custom_call.1} parent=1 // pred_check_branch
      %125 = sbr.rel (0) target = $region13
    $region12: #{tpu_custom_call.1} parent=1 // pred_region
      %s127 = ssub.s32 256, 256
      %128 = vsyncadd [#allocation3], %s127
      %s129 = sshll.u32 [#allocation2], 4
      %s130 = int_to_ptr.vmem [resolvable:$true] %s129
      %135 = dma.vmem_to_hbm [thread:$0]  %s130, 256, %s2, [#allocation3], 128, 128, 8
    $region13: #{tpu_custom_call.1} parent=1 // pred_fallthru
      _
    // Predicated region
    $region14: #{tpu_custom_call.1} parent=1 // pred_check
      _
    $region15: #{tpu_custom_call.1} parent=1 // pred_check_branch
      %137 = sbr.rel (0) target = $region17
    $region16: #{tpu_custom_call.1} parent=1 // pred_region
      %138 = dma.done [#allocation3], 256
    $region17: #{tpu_custom_call.1} parent=1 // pred_fallthru
      _
    %139 = vsyncpa [#allocation3], 1

</llo_original>
